<compile_context>
chip_gen: v7x
topology: tpu7x:2x2x1
jax: 0.10.0
libtpu: 0.0.40
codegen_flags: <defaults>
</compile_context>

<pallas_src>
import string

import jax
import jax.numpy as jnp
from jax.experimental import pallas as pl
from jax.experimental.pallas import tpu as pltpu

# ---- module hyperparameters (mirrors the PyTorch script) -------------------
ALL_LETTERS = string.ascii_letters + " .,;'"
N_LETTERS = len(ALL_LETTERS)          # 57
INPUT_SIZE = N_LETTERS
HIDDEN_SIZE = 128                     # n_hidden
OUTPUT_SIZE = 18                      # n_categories is 0 in the snippet; use a
                                      # typical nonzero class count (18)
NUM_LAYERS = 1

IN_PAD = 128                          # one-hot input padded 57 -> 128 lanes
OUT_PAD = 128                         # logits padded 18 -> 128 lanes
NEG_BIG = -1e30                       # padded logit lanes excluded from softmax


def gru_seq_kernel(x_ref, h0_ref, wg_ref, bg_ref, wl_ref, bl_ref,
                   logp_ref, hout_ref):
    """Full GRU sequence (batch=1) + Linear + LogSoftmax, grid=(T,).

    Fused gate columns (4H): [r, z, n_input, n_hidden]:
        r  = sigmoid(g[:, 0:H])                       (biases pre-summed)
        z  = sigmoid(g[:, H:2H])
        n  = tanh(g[:, 2H:3H] + r * g[:, 3H:4H])      (g[3H:4H] = W_hn h + b_hn)
        h' = (1 - z) * n + z * h
    The hidden state is carried in hout_ref (grid-constant output block).
    """
    H = HIDDEN_SIZE
    t = pl.program_id(0)

    @pl.when(t == 0)
    def _():
        hout_ref[...] = h0_ref[...]

    h = hout_ref[...]                                  # (1, H) f32
    x = x_ref[pl.ds(t, 1), :]                          # (1, IN_PAD) f32
    xh = jnp.concatenate([x, h], axis=-1)              # (1, IN_PAD + H)

    g = jnp.dot(xh, wg_ref[...],
                preferred_element_type=jnp.float32) + bg_ref[...]

    r = jax.nn.sigmoid(g[:, 0:H])
    z = jax.nn.sigmoid(g[:, H:2 * H])
    n = jnp.tanh(g[:, 2 * H:3 * H] + r * g[:, 3 * H:4 * H])
    h_new = (1.0 - z) * n + z * h
    hout_ref[...] = h_new

    # Linear head (lane-dense, padded to 128) + stable log-softmax.
    y = jnp.dot(h_new, wl_ref[...],
                preferred_element_type=jnp.float32) + bl_ref[...]
    m = jnp.max(y, axis=-1, keepdims=True)
    lse = jnp.log(jnp.sum(jnp.exp(y - m), axis=-1, keepdims=True)) + m
    logp_ref[pl.ds(t, 1), :] = y - lse


def _resident(shape):
    """Full-array block, constant across the time grid (DMA'd once, VMEM-resident)."""
    nd = len(shape)
    return pl.BlockSpec(shape, lambda t, _nd=nd: (0,) * _nd)


@jax.jit
def gru_forward(input1, hidden, params):
    """Mirrors GRU.forward, generalized over the sequence length.

    input1: (T, input_size) one-hot rows (T=1 reproduces the original
            single-character call exactly)
    hidden: (num_layers=1, 1, H)
    returns (log_probs (T, 1, output_size), hn (num_layers, 1, H))
    """
    w_ih, w_hh, b_ih, b_hh, w_lin, b_lin = params
    H = HIDDEN_SIZE
    T = input1.shape[0]

    # ---- layout prep (XLA side, cheap; done once per call) ----
    x = jnp.pad(input1.astype(jnp.float32),
                ((0, 0), (0, IN_PAD - INPUT_SIZE)))            # (T, IN_PAD)
    h0 = hidden.reshape(1, H).astype(jnp.float32)

    wi = w_ih.T                                                # (IN, 3H) [r,z,n]
    wh = w_hh.T                                                # (H, 3H)  [r,z,n]
    top = jnp.concatenate([wi, jnp.zeros((INPUT_SIZE, H), jnp.float32)], axis=1)
    top = jnp.pad(top, ((0, IN_PAD - INPUT_SIZE), (0, 0)))     # (IN_PAD, 4H)
    bot = jnp.concatenate([wh[:, :2 * H],
                           jnp.zeros((H, H), jnp.float32),
                           wh[:, 2 * H:]], axis=1)             # (H, 4H)
    w_gates = jnp.concatenate([top, bot], axis=0)              # (IN_PAD+H, 4H)
    b_gates = jnp.concatenate([b_ih[:2 * H] + b_hh[:2 * H],    # r,z pre-summed
                               b_ih[2 * H:],                   # b_in
                               b_hh[2 * H:]]).reshape(1, 4 * H)  # b_hn

    w_head = jnp.pad(w_lin.T, ((0, 0), (0, OUT_PAD - OUTPUT_SIZE)))  # (H, OUT_PAD)
    b_head = jnp.full((1, OUT_PAD), NEG_BIG, jnp.float32)
    b_head = b_head.at[0, :OUTPUT_SIZE].set(b_lin)

    logp_pad, h_final = pl.pallas_call(
        gru_seq_kernel,
        out_shape=(
            jax.ShapeDtypeStruct((T, OUT_PAD), jnp.float32),
            jax.ShapeDtypeStruct((1, H), jnp.float32),
        ),
        grid=(T,),
        in_specs=[
            _resident((T, IN_PAD)),
            _resident((1, H)),
            _resident((IN_PAD + H, 4 * H)),
            _resident((1, 4 * H)),
            _resident((H, OUT_PAD)),
            _resident((1, OUT_PAD)),
        ],
        out_specs=(
            _resident((T, OUT_PAD)),
            _resident((1, H)),
        ),
        compiler_params=pltpu.CompilerParams(
            dimension_semantics=("arbitrary",)),
    )(x, h0, w_gates, b_gates, w_head, b_head)

    logp = logp_pad[:, :OUTPUT_SIZE].reshape(T, 1, OUTPUT_SIZE)
    return logp, h_final.reshape(NUM_LAYERS, 1, H)


def init_params(key):
    """Deterministic parameter init matching nn.GRU / nn.Linear shapes."""
    H = HIDDEN_SIZE
    k = 1.0 / jnp.sqrt(H)
    ks = jax.random.split(key, 6)
    w_ih = jax.random.uniform(ks[0], (3 * H, INPUT_SIZE), jnp.float32, -k, k)
    w_hh = jax.random.uniform(ks[1], (3 * H, H), jnp.float32, -k, k)
    b_ih = jax.random.uniform(ks[2], (3 * H,), jnp.float32, -k, k)
    b_hh = jax.random.uniform(ks[3], (3 * H,), jnp.float32, -k, k)
    w_lin = jax.random.uniform(ks[4], (OUTPUT_SIZE, H), jnp.float32, -k, k)
    b_lin = jax.random.uniform(ks[5], (OUTPUT_SIZE,), jnp.float32, -k, k)
    return (w_ih, w_hh, b_ih, b_hh, w_lin, b_lin)


def reference_forward(input1, hidden, params):
    """Pure-JAX reference (unfused, original PyTorch gate math)."""
    w_ih, w_hh, b_ih, b_hh, w_lin, b_lin = params
    H = HIDDEN_SIZE

    def step(h, x):
        gi = x @ w_ih.T + b_ih
        gh = h @ w_hh.T + b_hh
        r = jax.nn.sigmoid(gi[:H] + gh[:H])
        z = jax.nn.sigmoid(gi[H:2 * H] + gh[H:2 * H])
        n = jnp.tanh(gi[2 * H:] + r * gh[2 * H:])
        h_new = (1.0 - z) * n + z * h
        y = h_new @ w_lin.T + b_lin
        return h_new, jax.nn.log_softmax(y)

    h0 = hidden.reshape(H).astype(jnp.float32)
    hT, logps = jax.lax.scan(step, h0, input1.astype(jnp.float32))
    T = input1.shape[0]
    return logps.reshape(T, 1, OUTPUT_SIZE), hT.reshape(NUM_LAYERS, 1, HIDDEN_SIZE)


def line_to_tensor(line):
    """lineToTensor with the batch dim squeezed: (len(line), n_letters) one-hot."""
    idx = jnp.array([ALL_LETTERS.find(c) for c in line], jnp.int32)
    return jax.nn.one_hot(idx, N_LETTERS, dtype=jnp.float32)


if __name__ == "__main__":
    key = jax.random.PRNGKey(0)
    params = init_params(key)

    line = "Bai"
    x_seq = line_to_tensor(line)                               # (3, 57)
    hidden = jnp.zeros((NUM_LAYERS, 1, HIDDEN_SIZE), jnp.float32)

    # Full name in ONE pallas_call (grid over the 3 characters, weights resident).
    logp_seq, hn_seq = gru_forward(x_seq, hidden, params)
    # Original single-character forward (T=1), exactly the PyTorch call shape.
    logp_1, hn_1 = gru_forward(x_seq[:1], hidden, params)
    jax.block_until_ready((logp_seq, hn_seq, logp_1, hn_1))

    ref_seq, ref_hn = reference_forward(x_seq, hidden, params)
    ref_1, ref_hn1 = reference_forward(x_seq[:1], hidden, params)

    assert logp_seq.shape == (len(line), 1, OUTPUT_SIZE)
    assert hn_seq.shape == (NUM_LAYERS, 1, HIDDEN_SIZE)
    assert logp_1.shape == (1, 1, OUTPUT_SIZE)
    assert jnp.allclose(logp_seq, ref_seq, atol=1e-5, rtol=1e-4)
    assert jnp.allclose(hn_seq, ref_hn, atol=1e-5, rtol=1e-4)
    assert jnp.allclose(logp_1, ref_1, atol=1e-5, rtol=1e-4)
    assert jnp.allclose(hn_1, ref_hn1, atol=1e-5, rtol=1e-4)

    print("KERNEL_OK")
</pallas_src>

<mosaic_0001>
module attributes {stable_mosaic.version = 11 : i64} {
  func.func @gru_seq_kernel(%arg0: i32, %arg1: memref<3x128xf32, #tpu.memory_space<vmem>>, %arg2: memref<1x128xf32, #tpu.memory_space<vmem>>, %arg3: memref<256x512xf32, #tpu.memory_space<vmem>>, %arg4: memref<1x512xf32, #tpu.memory_space<vmem>>, %arg5: memref<128x128xf32, #tpu.memory_space<vmem>>, %arg6: memref<1x128xf32, #tpu.memory_space<vmem>>, %arg7: memref<3x128xf32, #tpu.memory_space<vmem>>, %arg8: memref<1x128xf32, #tpu.memory_space<vmem>>) attributes {dimension_semantics = [#tpu.dimension_semantics<arbitrary>], iteration_bounds = array<i64: 3>, scalar_prefetch = 0 : i64, scratch_operands = 0 : i64, tpu.core_type = #tpu.core_type<tc>, window_params = [{pipeline_mode = #tpu.pipeline_mode<synchronous>, transform_indices = @transform_0, window_bounds = array<i64: 3, 128>}, {pipeline_mode = #tpu.pipeline_mode<synchronous>, transform_indices = @transform_1, window_bounds = array<i64: 1, 128>}, {pipeline_mode = #tpu.pipeline_mode<synchronous>, transform_indices = @transform_2, window_bounds = array<i64: 256, 512>}, {pipeline_mode = #tpu.pipeline_mode<synchronous>, transform_indices = @transform_3, window_bounds = array<i64: 1, 512>}, {pipeline_mode = #tpu.pipeline_mode<synchronous>, transform_indices = @transform_4, window_bounds = array<i64: 128, 128>}, {pipeline_mode = #tpu.pipeline_mode<synchronous>, transform_indices = @transform_5, window_bounds = array<i64: 1, 128>}, {pipeline_mode = #tpu.pipeline_mode<synchronous>, transform_indices = @transform_6, window_bounds = array<i64: 3, 128>}, {pipeline_mode = #tpu.pipeline_mode<synchronous>, transform_indices = @transform_7, window_bounds = array<i64: 1, 128>}]} {
    %c0_i32 = arith.constant 0 : i32
    %0 = arith.cmpi eq, %arg0, %c0_i32 : i32
    %1 = arith.extui %0 : i1 to i32
    %c0_i32_0 = arith.constant 0 : i32
    %2 = arith.cmpi ne, %1, %c0_i32_0 : i32
    scf.if %2 {
      %c0_20 = arith.constant 0 : index
      %c0_21 = arith.constant 0 : index
      %51 = vector.load %arg2[%c0_20, %c0_21] : memref<1x128xf32, #tpu.memory_space<vmem>>, vector<1x128xf32>
      %c0_22 = arith.constant 0 : index
      %c0_23 = arith.constant 0 : index
      %52 = vector.load %arg8[%c0_22, %c0_23] : memref<1x128xf32, #tpu.memory_space<vmem>>, vector<1x128xf32>
      tpu.vector_store %arg8[%c0_22, %c0_23], %51 {strides = array<i32>} : memref<1x128xf32, #tpu.memory_space<vmem>>, vector<1x128xf32>,
    } else {
    }
    %c0 = arith.constant 0 : index
    %c0_1 = arith.constant 0 : index
    %3 = vector.load %arg8[%c0, %c0_1] : memref<1x128xf32, #tpu.memory_space<vmem>>, vector<1x128xf32>
    %4 = arith.index_cast %arg0 : i32 to index
    %c0_2 = arith.constant 0 : index
    %5 = vector.load %arg1[%4, %c0_2] : memref<3x128xf32, #tpu.memory_space<vmem>>, vector<1x128xf32>
    %6 = tpu.concatenate %5, %3 in 1 : vector<1x128xf32>, vector<1x128xf32> -> vector<1x256xf32>
    %c0_3 = arith.constant 0 : index
    %c0_4 = arith.constant 0 : index
    %7 = vector.load %arg3[%c0_3, %c0_4] : memref<256x512xf32, #tpu.memory_space<vmem>>, vector<256x512xf32>
    %cst = arith.constant dense<0.000000e+00> : vector<1x512xf32>
    %8 = tpu.matmul %6, %7, %cst {dimension_numbers = #tpu.dot_dimension_numbers<[1], [0], [0], [1], [0, 0, 1, 1], [], []>} : vector<1x256xf32>, vector<256x512xf32>, vector<1x512xf32> -> vector<1x512xf32>
    %c0_5 = arith.constant 0 : index
    %c0_6 = arith.constant 0 : index
    %9 = vector.load %arg4[%c0_5, %c0_6] : memref<1x512xf32, #tpu.memory_space<vmem>>, vector<1x512xf32>
    %10 = arith.addf %8, %9 : vector<1x512xf32>
    %11 = vector.extract_strided_slice %10 {offsets = [0, 0], sizes = [1, 128], strides = [1, 1]} : vector<1x512xf32> to vector<1x128xf32>
    %12 = arith.negf %11 : vector<1x128xf32>
    %13 = math.exp %12 : vector<1x128xf32>
    %cst_7 = arith.constant 1.000000e+00 : f32
    %14 = vector.broadcast %cst_7 : f32 to vector<1x128xf32>
    %15 = arith.addf %14, %13 : vector<1x128xf32>
    %16 = arith.divf %14, %15 : vector<1x128xf32>
    %17 = vector.extract_strided_slice %10 {offsets = [0, 128], sizes = [1, 128], strides = [1, 1]} : vector<1x512xf32> to vector<1x128xf32>
    %18 = arith.negf %17 : vector<1x128xf32>
    %19 = math.exp %18 : vector<1x128xf32>
    %cst_8 = arith.constant 1.000000e+00 : f32
    %20 = vector.broadcast %cst_8 : f32 to vector<1x128xf32>
    %21 = arith.addf %20, %19 : vector<1x128xf32>
    %22 = arith.divf %20, %21 : vector<1x128xf32>
    %23 = vector.extract_strided_slice %10 {offsets = [0, 256], sizes = [1, 128], strides = [1, 1]} : vector<1x512xf32> to vector<1x128xf32>
    %24 = vector.extract_strided_slice %10 {offsets = [0, 384], sizes = [1, 128], strides = [1, 1]} : vector<1x512xf32> to vector<1x128xf32>
    %25 = arith.mulf %16, %24 : vector<1x128xf32>
    %26 = arith.addf %23, %25 : vector<1x128xf32>
    %27 = math.tanh %26 : vector<1x128xf32>
    %cst_9 = arith.constant 1.000000e+00 : f32
    %28 = vector.broadcast %cst_9 : f32 to vector<1x128xf32>
    %29 = arith.subf %28, %22 : vector<1x128xf32>
    %30 = arith.mulf %29, %27 : vector<1x128xf32>
    %31 = arith.mulf %22, %3 : vector<1x128xf32>
    %32 = arith.addf %30, %31 : vector<1x128xf32>
    %c0_10 = arith.constant 0 : index
    %c0_11 = arith.constant 0 : index
    %33 = vector.load %arg8[%c0_10, %c0_11] : memref<1x128xf32, #tpu.memory_space<vmem>>, vector<1x128xf32>
    tpu.vector_store %arg8[%c0_10, %c0_11], %32 {strides = array<i32>} : memref<1x128xf32, #tpu.memory_space<vmem>>, vector<1x128xf32>,
    %c0_12 = arith.constant 0 : index
    %c0_13 = arith.constant 0 : index
    %34 = vector.load %arg5[%c0_12, %c0_13] : memref<128x128xf32, #tpu.memory_space<vmem>>, vector<128x128xf32>
    %cst_14 = arith.constant dense<0.000000e+00> : vector<1x128xf32>
    %35 = tpu.matmul %32, %34, %cst_14 {dimension_numbers = #tpu.dot_dimension_numbers<[1], [0], [0], [1], [0, 0, 1, 1], [], []>} : vector<1x128xf32>, vector<128x128xf32>, vector<1x128xf32> -> vector<1x128xf32>
    %c0_15 = arith.constant 0 : index
    %c0_16 = arith.constant 0 : index
    %36 = vector.load %arg6[%c0_15, %c0_16] : memref<1x128xf32, #tpu.memory_space<vmem>>, vector<1x128xf32>
    %37 = arith.addf %35, %36 : vector<1x128xf32>
    %cst_17 = arith.constant dense<0xFF800000> : vector<1xf32>
    %38 = vector.multi_reduction <maximumf>, %37, %cst_17 [1] : vector<1x128xf32> to vector<1xf32>
    %39 = vector.shape_cast %38 : vector<1xf32> to vector<1x1xf32>
    %40 = vector.broadcast %39 : vector<1x1xf32> to vector<1x128xf32>
    %41 = arith.subf %37, %40 : vector<1x128xf32>
    %42 = math.exp %41 : vector<1x128xf32>
    %cst_18 = arith.constant dense<0.000000e+00> : vector<1xf32>
    %43 = vector.multi_reduction <add>, %42, %cst_18 [1] : vector<1x128xf32> to vector<1xf32>
    %44 = vector.shape_cast %43 : vector<1xf32> to vector<1x1xf32>
    %45 = math.log %44 : vector<1x1xf32>
    %46 = arith.addf %45, %39 : vector<1x1xf32>
    %47 = vector.broadcast %46 : vector<1x1xf32> to vector<1x128xf32>
    %48 = arith.subf %37, %47 : vector<1x128xf32>
    %49 = arith.index_cast %arg0 : i32 to index
    %c0_19 = arith.constant 0 : index
    %50 = vector.load %arg7[%49, %c0_19] : memref<3x128xf32, #tpu.memory_space<vmem>>, vector<1x128xf32>
    tpu.vector_store %arg7[%49, %c0_19], %48 {strides = array<i32>} : memref<3x128xf32, #tpu.memory_space<vmem>>, vector<1x128xf32>,
    return
  }
  func.func @transform_0(%arg0: i32) -> (i32, i32) {
    %c0_i32 = arith.constant 0 : i32
    %c0_i32_0 = arith.constant 0 : i32
    %c0_i32_1 = arith.constant 0 : i32
    return %c0_i32, %c0_i32_0 : i32, i32
  }
  func.func @transform_1(%arg0: i32) -> (i32, i32) {
    %c0_i32 = arith.constant 0 : i32
    %c0_i32_0 = arith.constant 0 : i32
    %c0_i32_1 = arith.constant 0 : i32
    return %c0_i32, %c0_i32_0 : i32, i32
  }
  func.func @transform_2(%arg0: i32) -> (i32, i32) {
    %c0_i32 = arith.constant 0 : i32
    %c0_i32_0 = arith.constant 0 : i32
    %c0_i32_1 = arith.constant 0 : i32
    return %c0_i32, %c0_i32_0 : i32, i32
  }
  func.func @transform_3(%arg0: i32) -> (i32, i32) {
    %c0_i32 = arith.constant 0 : i32
    %c0_i32_0 = arith.constant 0 : i32
    %c0_i32_1 = arith.constant 0 : i32
    return %c0_i32, %c0_i32_0 : i32, i32
  }
  func.func @transform_4(%arg0: i32) -> (i32, i32) {
    %c0_i32 = arith.constant 0 : i32
    %c0_i32_0 = arith.constant 0 : i32
    %c0_i32_1 = arith.constant 0 : i32
    return %c0_i32, %c0_i32_0 : i32, i32
  }
  func.func @transform_5(%arg0: i32) -> (i32, i32) {
    %c0_i32 = arith.constant 0 : i32
    %c0_i32_0 = arith.constant 0 : i32
    %c0_i32_1 = arith.constant 0 : i32
    return %c0_i32, %c0_i32_0 : i32, i32
  }
  func.func @transform_6(%arg0: i32) -> (i32, i32) {
    %c0_i32 = arith.constant 0 : i32
    %c0_i32_0 = arith.constant 0 : i32
    %c0_i32_1 = arith.constant 0 : i32
    return %c0_i32, %c0_i32_0 : i32, i32
  }
  func.func @transform_7(%arg0: i32) -> (i32, i32) {
    %c0_i32 = arith.constant 0 : i32
    %c0_i32_0 = arith.constant 0 : i32
    %c0_i32_1 = arith.constant 0 : i32
    return %c0_i32, %c0_i32_0 : i32, i32
  }
}

</mosaic_0001>

<llo_original>
// kernel: gru_forward.1
$region0: #{gru_forward.1}
  #allocation0 [shape = 'u32[]', space=smem, size = 0x4, offset = 0x4, fixed_abs, tag = 'smem constant byte address 0x4 - core index']
  #allocation1 [shape = 'u32[144,128]{1,0:T(1,128)}', space=vmem, size = 0x12000, scoped, tag = 'internal scratch']
  %s0 = inlined_call_operand.vmem [shape: f32[3,128], index: 0, kind: input, shape index: {}]
  %s1 = inlined_call_operand.vmem [shape: f32[1,128], index: 1, kind: input, shape index: {}]
  %s2 = inlined_call_operand.vmem [shape: f32[256,512], index: 2, kind: input, shape index: {}]
  %s3 = inlined_call_operand.vmem [shape: f32[1,512], index: 3, kind: input, shape index: {}]
  %s4 = inlined_call_operand.vmem [shape: f32[128,128], index: 4, kind: input, shape index: {}]
  %s5 = inlined_call_operand.vmem [shape: f32[1,128], index: 5, kind: input, shape index: {}]
  %s6 = inlined_call_operand.vmem [shape: f32[3,128], index: 6, kind: output, shape index: {0}]
  %s7 = inlined_call_operand.hbm [shape: f32[1,128], index: 7, kind: output, shape index: {1}]
  %8 = xla_tuple %s6, %s7
  %s9 = sld [smem:[#allocation0]]
  $region69: #{gru_forward.1} parent=0
    _
  %s11 = ssub.s32 1, %s9
  %s12 = scalar_select 0, %s11, %s9
  $region1: #{gru_forward.1} parent=0
    #allocation2 [shape = 'u8[512]{0}', space=vmem, size = 0x400, scoped, tag = 'output window, operand 1, single buffered']
    #allocation3 [shape = 's32[2]{0}', space=sflag, size = 0x8, scoped, tag = 'scoped memory for gru_forward.1']
    %13 = vsyncpa [#allocation3], 0
    loop: start=0, step=1, limit=5
    $region2: #{gru_forward.1} parent=1 // loop_pre_header
      _
    $region3: #{gru_forward.1} parent=1 // loop_header
      %s15 = sphi 0, %s19
      %p16 = scmp.ge.s32.totalorder %s15, 5
      %s23 = sphi 0, %s23
      %s25 = sphi 0, %s23
      %s26 = sphi 0, %s25
      %s40 = sphi 0, %s26
      %s44 = sphi 0, %s44
      %s46 = sphi 0, %s44
      %s47 = sphi 0, %s46
      %s61 = sphi 0, %s47
      %s65 = sphi 0, %s65
      %s67 = sphi 0, %s65
      %s68 = sphi 0, %s67
      %s82 = sphi 0, %s68
      %s86 = sphi 0, %s86
      %s88 = sphi 0, %s86
      %s89 = sphi 0, %s88
      %s103 = sphi 0, %s89
      %s107 = sphi 0, %s107
      %s109 = sphi 0, %s107
      %s110 = sphi 0, %s109
      %s124 = sphi 0, %s110
      %s128 = sphi 0, %s128
      %s130 = sphi 0, %s128
      %s131 = sphi 0, %s130
      %s145 = sphi 0, %s131
      %s149 = sphi 0, %s149
      %s151 = sphi 0, %s149
      %s152 = sphi 0, %s151
      %s166 = sphi 0, %s152
      %s170 = sphi 0, %s170
      %s172 = sphi 0, %s170
      %s173 = sphi 0, %s172
      %s187 = sphi 0, %s173
    $region4: #{gru_forward.1} parent=1 // loop_header_branch
      %18 = sbr.rel (%p16) target = $region8
    $region5: #{gru_forward.1} parent=1 // loop_body
      %s20 = ssub.s32 %s15, 1
      %s21 = ssub.s32 %s15, 2
      %s22 = sadd.s32 %s15, 1
      %s24 = sadd.s32 %s23, 1
      %p27 = scmp.eq.s32.totalorder %s15, 2
      %p28 = scmp.ne.s32.totalorder %s23, %s25
      %p29 = scmp.eq.s32.totalorder %s15, 0
      %p30 = por %p28, %p29
      %p31 = scmp.ne.s32.totalorder %s23, %s25
      %p32 = scmp.eq.s32.totalorder %s20, 2
      %p33 = por %p31, %p32
      %p34 = scmp.ne.s32.totalorder %s25, %s26
      %p35 = scmp.eq.s32.totalorder %s20, 0
      %p36 = por %p34, %p35
      %p37 = scmp.ne.s32.totalorder %s25, %s26
      %p38 = scmp.eq.s32.totalorder %s21, 2
      %p39 = por %p37, %p38
      %p41 = scmp.ne.s32.totalorder %s26, %s40
      %p42 = scmp.eq.s32.totalorder %s21, 0
      %p43 = por %p41, %p42
      %s45 = sadd.s32 %s44, 1
      %p48 = scmp.eq.s32.totalorder %s15, 2
      %p49 = scmp.ne.s32.totalorder %s44, %s46
      %p50 = scmp.eq.s32.totalorder %s15, 0
      %p51 = por %p49, %p50
      %p52 = scmp.ne.s32.totalorder %s44, %s46
      %p53 = scmp.eq.s32.totalorder %s20, 2
      %p54 = por %p52, %p53
      %p55 = scmp.ne.s32.totalorder %s46, %s47
      %p56 = scmp.eq.s32.totalorder %s20, 0
      %p57 = por %p55, %p56
      %p58 = scmp.ne.s32.totalorder %s46, %s47
      %p59 = scmp.eq.s32.totalorder %s21, 2
      %p60 = por %p58, %p59
      %p62 = scmp.ne.s32.totalorder %s47, %s61
      %p63 = scmp.eq.s32.totalorder %s21, 0
      %p64 = por %p62, %p63
      %s66 = sadd.s32 %s65, 1
      %p69 = scmp.eq.s32.totalorder %s15, 2
      %p70 = scmp.ne.s32.totalorder %s65, %s67
      %p71 = scmp.eq.s32.totalorder %s15, 0
      %p72 = por %p70, %p71
      %p73 = scmp.ne.s32.totalorder %s65, %s67
      %p74 = scmp.eq.s32.totalorder %s20, 2
      %p75 = por %p73, %p74
      %p76 = scmp.ne.s32.totalorder %s67, %s68
      %p77 = scmp.eq.s32.totalorder %s20, 0
      %p78 = por %p76, %p77
      %p79 = scmp.ne.s32.totalorder %s67, %s68
      %p80 = scmp.eq.s32.totalorder %s21, 2
      %p81 = por %p79, %p80
      %p83 = scmp.ne.s32.totalorder %s68, %s82
      %p84 = scmp.eq.s32.totalorder %s21, 0
      %p85 = por %p83, %p84
      %s87 = sadd.s32 %s86, 1
      %p90 = scmp.eq.s32.totalorder %s15, 2
      %p91 = scmp.ne.s32.totalorder %s86, %s88
      %p92 = scmp.eq.s32.totalorder %s15, 0
      %p93 = por %p91, %p92
      %p94 = scmp.ne.s32.totalorder %s86, %s88
      %p95 = scmp.eq.s32.totalorder %s20, 2
      %p96 = por %p94, %p95
      %p97 = scmp.ne.s32.totalorder %s88, %s89
      %p98 = scmp.eq.s32.totalorder %s20, 0
      %p99 = por %p97, %p98
      %p100 = scmp.ne.s32.totalorder %s88, %s89
      %p101 = scmp.eq.s32.totalorder %s21, 2
      %p102 = por %p100, %p101
      %p104 = scmp.ne.s32.totalorder %s89, %s103
      %p105 = scmp.eq.s32.totalorder %s21, 0
      %p106 = por %p104, %p105
      %s108 = sadd.s32 %s107, 1
      %p111 = scmp.eq.s32.totalorder %s15, 2
      %p112 = scmp.ne.s32.totalorder %s107, %s109
      %p113 = scmp.eq.s32.totalorder %s15, 0
      %p114 = por %p112, %p113
      %p115 = scmp.ne.s32.totalorder %s107, %s109
      %p116 = scmp.eq.s32.totalorder %s20, 2
      %p117 = por %p115, %p116
      %p118 = scmp.ne.s32.totalorder %s109, %s110
      %p119 = scmp.eq.s32.totalorder %s20, 0
      %p120 = por %p118, %p119
      %p121 = scmp.ne.s32.totalorder %s109, %s110
      %p122 = scmp.eq.s32.totalorder %s21, 2
      %p123 = por %p121, %p122
      %p125 = scmp.ne.s32.totalorder %s110, %s124
      %p126 = scmp.eq.s32.totalorder %s21, 0
      %p127 = por %p125, %p126
      %s129 = sadd.s32 %s128, 1
      %p132 = scmp.eq.s32.totalorder %s15, 2
      %p133 = scmp.ne.s32.totalorder %s128, %s130
      %p134 = scmp.eq.s32.totalorder %s15, 0
      %p135 = por %p133, %p134
      %p136 = scmp.ne.s32.totalorder %s128, %s130
      %p137 = scmp.eq.s32.totalorder %s20, 2
      %p138 = por %p136, %p137
      %p139 = scmp.ne.s32.totalorder %s130, %s131
      %p140 = scmp.eq.s32.totalorder %s20, 0
      %p141 = por %p139, %p140
      %p142 = scmp.ne.s32.totalorder %s130, %s131
      %p143 = scmp.eq.s32.totalorder %s21, 2
      %p144 = por %p142, %p143
      %p146 = scmp.ne.s32.totalorder %s131, %s145
      %p147 = scmp.eq.s32.totalorder %s21, 0
      %p148 = por %p146, %p147
      %s150 = sadd.s32 %s149, 1
      %p153 = scmp.eq.s32.totalorder %s15, 2
      %p154 = scmp.ne.s32.totalorder %s149, %s151
      %p155 = scmp.eq.s32.totalorder %s15, 0
      %p156 = por %p154, %p155
      %p157 = scmp.ne.s32.totalorder %s149, %s151
      %p158 = scmp.eq.s32.totalorder %s20, 2
      %p159 = por %p157, %p158
      %p160 = scmp.ne.s32.totalorder %s151, %s152
      %p161 = scmp.eq.s32.totalorder %s20, 0
      %p162 = por %p160, %p161
      %p163 = scmp.ne.s32.totalorder %s151, %s152
      %p164 = scmp.eq.s32.totalorder %s21, 2
      %p165 = por %p163, %p164
      %p167 = scmp.ne.s32.totalorder %s152, %s166
      %p168 = scmp.eq.s32.totalorder %s21, 0
      %p169 = por %p167, %p168
      %s171 = sadd.s32 %s170, 1
      %p174 = scmp.eq.s32.totalorder %s15, 2
      %p175 = scmp.ne.s32.totalorder %s170, %s172
      %p176 = scmp.eq.s32.totalorder %s15, 0
      %p177 = por %p175, %p176
      %p178 = scmp.ne.s32.totalorder %s170, %s172
      %p179 = scmp.eq.s32.totalorder %s20, 2
      %p180 = por %p178, %p179
      %p181 = scmp.ne.s32.totalorder %s172, %s173
      %p182 = scmp.eq.s32.totalorder %s20, 0
      %p183 = por %p181, %p182
      %p184 = scmp.ne.s32.totalorder %s172, %s173
      %p185 = scmp.eq.s32.totalorder %s21, 2
      %p186 = por %p184, %p185
      %p188 = scmp.ne.s32.totalorder %s173, %s187
      %p189 = scmp.eq.s32.totalorder %s21, 0
      %p190 = por %p188, %p189
      %p191 = scmp.le.s32.totalorder 1, %s15
      %p192 = scmp.lt.s32.totalorder %s15, 4
      %p193 = pnand %p191, %p192
      %p194 = pneg %p193
      // Predicated region
      $region9: #{gru_forward.1} parent=5 // pred_check
        _
      $region10: #{gru_forward.1} parent=5 // pred_check_branch
        %196 = sbr.rel (%p193) target = $region12
      $region11: #{gru_forward.1} parent=5 // pred_region
        %s197 = ssub.s32 %s15, 1
        // Predicated region
        $region13: #{gru_forward.1} parent=11 // pred_check
          %p198 = pneg %p36
        $region14: #{gru_forward.1} parent=11 // pred_check_branch
          %200 = sbr.rel (%p198) target = $region16
        $region15: #{gru_forward.1} parent=11 // pred_region
          _
        $region16: #{gru_forward.1} parent=11 // pred_fallthru
          _
        // Predicated region
        $region17: #{gru_forward.1} parent=11 // pred_check
          %p201 = pneg %p57
        $region18: #{gru_forward.1} parent=11 // pred_check_branch
          %203 = sbr.rel (%p201) target = $region20
        $region19: #{gru_forward.1} parent=11 // pred_region
          _
        $region20: #{gru_forward.1} parent=11 // pred_fallthru
          _
        // Predicated region
        $region21: #{gru_forward.1} parent=11 // pred_check
          %p204 = pneg %p78
        $region22: #{gru_forward.1} parent=11 // pred_check_branch
          %206 = sbr.rel (%p204) target = $region24
        $region23: #{gru_forward.1} parent=11 // pred_region
          _
        $region24: #{gru_forward.1} parent=11 // pred_fallthru
          _
        // Predicated region
        $region25: #{gru_forward.1} parent=11 // pred_check
          %p207 = pneg %p99
        $region26: #{gru_forward.1} parent=11 // pred_check_branch
          %209 = sbr.rel (%p207) target = $region28
        $region27: #{gru_forward.1} parent=11 // pred_region
          _
        $region28: #{gru_forward.1} parent=11 // pred_fallthru
          _
        // Predicated region
        $region29: #{gru_forward.1} parent=11 // pred_check
          %p210 = pneg %p120
        $region30: #{gru_forward.1} parent=11 // pred_check_branch
          %212 = sbr.rel (%p210) target = $region32
        $region31: #{gru_forward.1} parent=11 // pred_region
          _
        $region32: #{gru_forward.1} parent=11 // pred_fallthru
          _
        // Predicated region
        $region33: #{gru_forward.1} parent=11 // pred_check
          %p213 = pneg %p141
        $region34: #{gru_forward.1} parent=11 // pred_check_branch
          %215 = sbr.rel (%p213) target = $region36
        $region35: #{gru_forward.1} parent=11 // pred_region
          _
        $region36: #{gru_forward.1} parent=11 // pred_fallthru
          _
      $region12: #{gru_forward.1} parent=5 // pred_fallthru
        _
      %p216 = scmp.lt.s32.totalorder %s15, 3
      // Predicated region
      $region37: #{gru_forward.1} parent=5 // pred_check
        %p217 = pneg %p216
      $region38: #{gru_forward.1} parent=5 // pred_check_branch
        %219 = sbr.rel (%p217) target = $region40
      $region39: #{gru_forward.1} parent=5 // pred_region
        _
      $region40: #{gru_forward.1} parent=5 // pred_fallthru
        _
      %p220 = scmp.le.s32.totalorder 1, %s15
      %p221 = scmp.lt.s32.totalorder %s15, 4
      %p222 = pnand %p220, %p221
      %p223 = pneg %p222
      // Predicated region
      $region41: #{gru_forward.1} parent=5 // pred_check
        _
      $region42: #{gru_forward.1} parent=5 // pred_check_branch
        %225 = sbr.rel (%p222) target = $region44
      $region43: #{gru_forward.1} parent=5 // pred_region
        %s226 = ssub.s32 %s15, 1
        %p227 = pneg %p36
        %p228 = pneg %p33
        %p229 = pneg %p57
        %p230 = pneg %p54
        %p231 = pneg %p78
        %p232 = pneg %p75
        %p233 = pneg %p99
        %p234 = pneg %p96
        %p235 = pneg %p120
        %p236 = pneg %p117
        %p237 = pneg %p141
        %p238 = pneg %p138
        %p239 = pneg %p162
        %p240 = pneg %p159
        %p241 = pneg %p183
        %p242 = pneg %p180
        %p243 = scmp.eq.s32.totalorder %s20, 0
        // Predicated region
        $region45: #{gru_forward.1} parent=43 // pred_check
          %p244 = pneg %p243
        $region46: #{gru_forward.1} parent=43 // pred_check_branch
          %246 = sbr.rel (%p244) target = $region48
        $region47: #{gru_forward.1} parent=43 // pred_region
          %v247 = vld [vmem:[%s1] sm:$0x1]
          %248 = vst [vmem:[#allocation2] sm:$0x1] %v247
        $region48: #{gru_forward.1} parent=43 // pred_fallthru
          _
        %v249 = vld [vmem:[#allocation2] sm:$0x1]
        %s250 = scalar_lea.vmem %s0, %s20
        %v251 = vld [vmem:[%s250] sm:$0x1]
        %v252 = vld [vmem:[%s2] sm:$0xff]
        %v253 = vld [vmem:[%s2 + $0x8] sm:$0xff]
        %v254 = vld [vmem:[%s2 + $0x10] sm:$0xff]
        %v255 = vld [vmem:[%s2 + $0x18] sm:$0xff]
        %v256 = vld [vmem:[%s2 + $0x20] sm:$0xff]
        %v257 = vld [vmem:[%s2 + $0x28] sm:$0xff]
        %v258 = vld [vmem:[%s2 + $0x30] sm:$0xff]
        %v259 = vld [vmem:[%s2 + $0x38] sm:$0xff]
        %v260 = vld [vmem:[%s2 + $0x40] sm:$0xff]
        %v261 = vld [vmem:[%s2 + $0x48] sm:$0xff]
        %v262 = vld [vmem:[%s2 + $0x50] sm:$0xff]
        %v263 = vld [vmem:[%s2 + $0x58] sm:$0xff]
        %v264 = vld [vmem:[%s2 + $0x60] sm:$0xff]
        %v265 = vld [vmem:[%s2 + $0x68] sm:$0xff]
        %v266 = vld [vmem:[%s2 + $0x70] sm:$0xff]
        %v267 = vld [vmem:[%s2 + $0x78] sm:$0xff]
        %v268 = vld [vmem:[%s2 + $0x80] sm:$0xff]
        %v269 = vld [vmem:[%s2 + $0x88] sm:$0xff]
        %v270 = vld [vmem:[%s2 + $0x90] sm:$0xff]
        %v271 = vld [vmem:[%s2 + $0x98] sm:$0xff]
        %v272 = vld [vmem:[%s2 + $0xa0] sm:$0xff]
        %v273 = vld [vmem:[%s2 + $0xa8] sm:$0xff]
        %v274 = vld [vmem:[%s2 + $0xb0] sm:$0xff]
        %v275 = vld [vmem:[%s2 + $0xb8] sm:$0xff]
        %v276 = vld [vmem:[%s2 + $0xc0] sm:$0xff]
        %v277 = vld [vmem:[%s2 + $0xc8] sm:$0xff]
        %v278 = vld [vmem:[%s2 + $0xd0] sm:$0xff]
        %v279 = vld [vmem:[%s2 + $0xd8] sm:$0xff]
        %v280 = vld [vmem:[%s2 + $0xe0] sm:$0xff]
        %v281 = vld [vmem:[%s2 + $0xe8] sm:$0xff]
        %v282 = vld [vmem:[%s2 + $0xf0] sm:$0xff]
        %v283 = vld [vmem:[%s2 + $0xf8] sm:$0xff]
        %v284 = vld [vmem:[%s2 + $0x100] sm:$0xff]
        %v285 = vld [vmem:[%s2 + $0x108] sm:$0xff]
        %v286 = vld [vmem:[%s2 + $0x110] sm:$0xff]
        %v287 = vld [vmem:[%s2 + $0x118] sm:$0xff]
        %v288 = vld [vmem:[%s2 + $0x120] sm:$0xff]
        %v289 = vld [vmem:[%s2 + $0x128] sm:$0xff]
        %v290 = vld [vmem:[%s2 + $0x130] sm:$0xff]
        %v291 = vld [vmem:[%s2 + $0x138] sm:$0xff]
        %v292 = vld [vmem:[%s2 + $0x140] sm:$0xff]
        %v293 = vld [vmem:[%s2 + $0x148] sm:$0xff]
        %v294 = vld [vmem:[%s2 + $0x150] sm:$0xff]
        %v295 = vld [vmem:[%s2 + $0x158] sm:$0xff]
        %v296 = vld [vmem:[%s2 + $0x160] sm:$0xff]
        %v297 = vld [vmem:[%s2 + $0x168] sm:$0xff]
        %v298 = vld [vmem:[%s2 + $0x170] sm:$0xff]
        %v299 = vld [vmem:[%s2 + $0x178] sm:$0xff]
        %v300 = vld [vmem:[%s2 + $0x180] sm:$0xff]
        %v301 = vld [vmem:[%s2 + $0x188] sm:$0xff]
        %v302 = vld [vmem:[%s2 + $0x190] sm:$0xff]
        %v303 = vld [vmem:[%s2 + $0x198] sm:$0xff]
        %v304 = vld [vmem:[%s2 + $0x1a0] sm:$0xff]
        %v305 = vld [vmem:[%s2 + $0x1a8] sm:$0xff]
        %v306 = vld [vmem:[%s2 + $0x1b0] sm:$0xff]
        %v307 = vld [vmem:[%s2 + $0x1b8] sm:$0xff]
        %v308 = vld [vmem:[%s2 + $0x1c0] sm:$0xff]
        %v309 = vld [vmem:[%s2 + $0x1c8] sm:$0xff]
        %v310 = vld [vmem:[%s2 + $0x1d0] sm:$0xff]
        %v311 = vld [vmem:[%s2 + $0x1d8] sm:$0xff]
        %v312 = vld [vmem:[%s2 + $0x1e0] sm:$0xff]
        %v313 = vld [vmem:[%s2 + $0x1e8] sm:$0xff]
        %v314 = vld [vmem:[%s2 + $0x1f0] sm:$0xff]
        %v315 = vld [vmem:[%s2 + $0x1f8] sm:$0xff]
        %v316 = vld [vmem:[%s2 + $0x200] sm:$0xff]
        %v317 = vld [vmem:[%s2 + $0x208] sm:$0xff]
        %v318 = vld [vmem:[%s2 + $0x210] sm:$0xff]
        %v319 = vld [vmem:[%s2 + $0x218] sm:$0xff]
        %v320 = vld [vmem:[%s2 + $0x220] sm:$0xff]
        %v321 = vld [vmem:[%s2 + $0x228] sm:$0xff]
        %v322 = vld [vmem:[%s2 + $0x230] sm:$0xff]
        %v323 = vld [vmem:[%s2 + $0x238] sm:$0xff]
        %v324 = vld [vmem:[%s2 + $0x240] sm:$0xff]
        %v325 = vld [vmem:[%s2 + $0x248] sm:$0xff]
        %v326 = vld [vmem:[%s2 + $0x250] sm:$0xff]
        %v327 = vld [vmem:[%s2 + $0x258] sm:$0xff]
        %v328 = vld [vmem:[%s2 + $0x260] sm:$0xff]
        %v329 = vld [vmem:[%s2 + $0x268] sm:$0xff]
        %v330 = vld [vmem:[%s2 + $0x270] sm:$0xff]
        %v331 = vld [vmem:[%s2 + $0x278] sm:$0xff]
        %v332 = vld [vmem:[%s2 + $0x280] sm:$0xff]
        %v333 = vld [vmem:[%s2 + $0x288] sm:$0xff]
        %v334 = vld [vmem:[%s2 + $0x290] sm:$0xff]
        %v335 = vld [vmem:[%s2 + $0x298] sm:$0xff]
        %v336 = vld [vmem:[%s2 + $0x2a0] sm:$0xff]
        %v337 = vld [vmem:[%s2 + $0x2a8] sm:$0xff]
        %v338 = vld [vmem:[%s2 + $0x2b0] sm:$0xff]
        %v339 = vld [vmem:[%s2 + $0x2b8] sm:$0xff]
        %v340 = vld [vmem:[%s2 + $0x2c0] sm:$0xff]
        %v341 = vld [vmem:[%s2 + $0x2c8] sm:$0xff]
        %v342 = vld [vmem:[%s2 + $0x2d0] sm:$0xff]
        %v343 = vld [vmem:[%s2 + $0x2d8] sm:$0xff]
        %v344 = vld [vmem:[%s2 + $0x2e0] sm:$0xff]
        %v345 = vld [vmem:[%s2 + $0x2e8] sm:$0xff]
        %v346 = vld [vmem:[%s2 + $0x2f0] sm:$0xff]
        %v347 = vld [vmem:[%s2 + $0x2f8] sm:$0xff]
        %v348 = vld [vmem:[%s2 + $0x300] sm:$0xff]
        %v349 = vld [vmem:[%s2 + $0x308] sm:$0xff]
        %v350 = vld [vmem:[%s2 + $0x310] sm:$0xff]
        %v351 = vld [vmem:[%s2 + $0x318] sm:$0xff]
        %v352 = vld [vmem:[%s2 + $0x320] sm:$0xff]
        %v353 = vld [vmem:[%s2 + $0x328] sm:$0xff]
        %v354 = vld [vmem:[%s2 + $0x330] sm:$0xff]
        %v355 = vld [vmem:[%s2 + $0x338] sm:$0xff]
        %v356 = vld [vmem:[%s2 + $0x340] sm:$0xff]
        %v357 = vld [vmem:[%s2 + $0x348] sm:$0xff]
        %v358 = vld [vmem:[%s2 + $0x350] sm:$0xff]
        %v359 = vld [vmem:[%s2 + $0x358] sm:$0xff]
        %v360 = vld [vmem:[%s2 + $0x360] sm:$0xff]
        %v361 = vld [vmem:[%s2 + $0x368] sm:$0xff]
        %v362 = vld [vmem:[%s2 + $0x370] sm:$0xff]
        %v363 = vld [vmem:[%s2 + $0x378] sm:$0xff]
        %v364 = vld [vmem:[%s2 + $0x380] sm:$0xff]
        %v365 = vld [vmem:[%s2 + $0x388] sm:$0xff]
        %v366 = vld [vmem:[%s2 + $0x390] sm:$0xff]
        %v367 = vld [vmem:[%s2 + $0x398] sm:$0xff]
        %v368 = vld [vmem:[%s2 + $0x3a0] sm:$0xff]
        %v369 = vld [vmem:[%s2 + $0x3a8] sm:$0xff]
        %v370 = vld [vmem:[%s2 + $0x3b0] sm:$0xff]
        %v371 = vld [vmem:[%s2 + $0x3b8] sm:$0xff]
        %v372 = vld [vmem:[%s2 + $0x3c0] sm:$0xff]
        %v373 = vld [vmem:[%s2 + $0x3c8] sm:$0xff]
        %v374 = vld [vmem:[%s2 + $0x3d0] sm:$0xff]
        %v375 = vld [vmem:[%s2 + $0x3d8] sm:$0xff]
        %v376 = vld [vmem:[%s2 + $0x3e0] sm:$0xff]
        %v377 = vld [vmem:[%s2 + $0x3e8] sm:$0xff]
        %v378 = vld [vmem:[%s2 + $0x3f0] sm:$0xff]
        %v379 = vld [vmem:[%s2 + $0x3f8] sm:$0xff]
        %v380 = vld [vmem:[%s3] sm:$0xf]
        %v382 = vlaneseq
        %v383 = vshrl.u32 %v382, 7
        %v384 = vsub.s32 0, %v383
        %v385 = vrot.slane %v380, %v384
        %v386 = vlaneseq
        %v387 = vshrl.u32 %v386, 7
        %v388 = vsub.s32 1, %v387
        %v389 = vrot.slane %v380, %v388
        %v390 = vlaneseq
        %v391 = vshrl.u32 %v390, 7
        %v392 = vsub.s32 2, %v391
        %v393 = vrot.slane %v380, %v392
        %v394 = vlaneseq
        %v395 = vshrl.u32 %v394, 7
        %v396 = vsub.s32 3, %v395
        %v397 = vrot.slane %v380, %v396
        %402 = vmatprep.subr.mxu0 %v253
        %403 = vmatpush1.msra.mxu0 %v252
        %404 = vmatprep.subr.mxu0 %v257
        %405 = vmatpush1.msra.mxu0 %v256
        %406 = vmatprep.subr.mxu0 %v261
        %407 = vmatpush1.msra.mxu0 %v260
        %408 = vmatprep.subr.mxu0 %v265
        %409 = vmatpush1.msra.mxu0 %v264
        %410 = vmatprep.subr.mxu0 %v269
        %411 = vmatpush1.msra.mxu0 %v268
        %412 = vmatprep.subr.mxu0 %v273
        %413 = vmatpush1.msra.mxu0 %v272
        %414 = vmatprep.subr.mxu0 %v277
        %415 = vmatpush1.msra.mxu0 %v276
        %416 = vmatprep.subr.mxu0 %v281
        %417 = vmatpush1.msra.mxu0 %v280
        %418 = vmatprep.subr.mxu0 %v285
        %419 = vmatpush1.msra.mxu0 %v284
        %420 = vmatprep.subr.mxu0 %v289
        %421 = vmatpush1.msra.mxu0 %v288
        %422 = vmatprep.subr.mxu0 %v293
        %423 = vmatpush1.msra.mxu0 %v292
        %424 = vmatprep.subr.mxu0 %v297
        %425 = vmatpush1.msra.mxu0 %v296
        %426 = vmatprep.subr.mxu0 %v301
        %427 = vmatpush1.msra.mxu0 %v300
        %428 = vmatprep.subr.mxu0 %v305
        %429 = vmatpush1.msra.mxu0 %v304
        %430 = vmatprep.subr.mxu0 %v309
        %431 = vmatpush1.msra.mxu0 %v308
        %432 = vmatprep.subr.mxu0 %v313
        %433 = vmatpush1.msra.mxu0 %v312
        %434 = vmatprep.subr.mxu0 %v317
        %435 = vmatpush1.msra.mxu0 %v316
        %436 = vmatprep.subr.mxu0 %v321
        %437 = vmatpush1.msra.mxu0 %v320
        %438 = vmatprep.subr.mxu0 %v325
        %439 = vmatpush1.msra.mxu0 %v324
        %440 = vmatprep.subr.mxu0 %v329
        %441 = vmatpush1.msra.mxu0 %v328
        %442 = vmatprep.subr.mxu0 %v333
        %443 = vmatpush1.msra.mxu0 %v332
        %444 = vmatprep.subr.mxu0 %v337
        %445 = vmatpush1.msra.mxu0 %v336
        %446 = vmatprep.subr.mxu0 %v341
        %447 = vmatpush1.msra.mxu0 %v340
        %448 = vmatprep.subr.mxu0 %v345
        %449 = vmatpush1.msra.mxu0 %v344
        %450 = vmatprep.subr.mxu0 %v349
        %451 = vmatpush1.msra.mxu0 %v348
        %452 = vmatprep.subr.mxu0 %v353
        %453 = vmatpush1.msra.mxu0 %v352
        %454 = vmatprep.subr.mxu0 %v357
        %455 = vmatpush1.msra.mxu0 %v356
        %456 = vmatprep.subr.mxu0 %v361
        %457 = vmatpush1.msra.mxu0 %v360
        %458 = vmatprep.subr.mxu0 %v365
        %459 = vmatpush1.msra.mxu0 %v364
        %460 = vmatprep.subr.mxu0 %v369
        %461 = vmatpush1.msra.mxu0 %v368
        %462 = vmatprep.subr.mxu0 %v373
        %463 = vmatpush1.msra.mxu0 %v372
        %464 = vmatprep.subr.mxu0 %v377
        %465 = vmatpush1.msra.mxu0 %v376
        %466 = vmatprep.mubr.f32.mxu0 %v249
        %467 = vmatmul.mubr.f32.gmra.mrb[0].mxu0 %v251
        %v468 = vpop.f32.mrb[0].mxu0
        %v469 = vadd.f32 %v385, %v468
        %v470 = vpop.f32.mrb[0].mxu0
        %v471 = vadd.f32 %v389, %v470
        %472 = vdwg.mxu0
        %473 = vmatprep.subr.mxu0 %v255
        %474 = vmatpush1.msra.mxu0 %v254
        %475 = vmatprep.subr.mxu0 %v259
        %476 = vmatpush1.msra.mxu0 %v258
        %477 = vmatprep.subr.mxu0 %v263
        %478 = vmatpush1.msra.mxu0 %v262
        %479 = vmatprep.subr.mxu0 %v267
        %480 = vmatpush1.msra.mxu0 %v266
        %481 = vmatprep.subr.mxu0 %v271
        %482 = vmatpush1.msra.mxu0 %v270
        %483 = vmatprep.subr.mxu0 %v275
        %484 = vmatpush1.msra.mxu0 %v274
        %485 = vmatprep.subr.mxu0 %v279
        %486 = vmatpush1.msra.mxu0 %v278
        %487 = vmatprep.subr.mxu0 %v283
        %488 = vmatpush1.msra.mxu0 %v282
        %489 = vmatprep.subr.mxu0 %v287
        %490 = vmatpush1.msra.mxu0 %v286
        %491 = vmatprep.subr.mxu0 %v291
        %492 = vmatpush1.msra.mxu0 %v290
        %493 = vmatprep.subr.mxu0 %v295
        %494 = vmatpush1.msra.mxu0 %v294
        %495 = vmatprep.subr.mxu0 %v299
        %496 = vmatpush1.msra.mxu0 %v298
        %497 = vmatprep.subr.mxu0 %v303
        %498 = vmatpush1.msra.mxu0 %v302
        %499 = vmatprep.subr.mxu0 %v307
        %500 = vmatpush1.msra.mxu0 %v306
        %501 = vmatprep.subr.mxu0 %v311
        %502 = vmatpush1.msra.mxu0 %v310
        %503 = vmatprep.subr.mxu0 %v315
        %504 = vmatpush1.msra.mxu0 %v314
        %505 = vmatprep.subr.mxu0 %v319
        %506 = vmatpush1.msra.mxu0 %v318
        %507 = vmatprep.subr.mxu0 %v323
        %508 = vmatpush1.msra.mxu0 %v322
        %509 = vmatprep.subr.mxu0 %v327
        %510 = vmatpush1.msra.mxu0 %v326
        %511 = vmatprep.subr.mxu0 %v331
        %512 = vmatpush1.msra.mxu0 %v330
        %513 = vmatprep.subr.mxu0 %v335
        %514 = vmatpush1.msra.mxu0 %v334
        %515 = vmatprep.subr.mxu0 %v339
        %516 = vmatpush1.msra.mxu0 %v338
        %517 = vmatprep.subr.mxu0 %v343
        %518 = vmatpush1.msra.mxu0 %v342
        %519 = vmatprep.subr.mxu0 %v347
        %520 = vmatpush1.msra.mxu0 %v346
        %521 = vmatprep.subr.mxu0 %v351
        %522 = vmatpush1.msra.mxu0 %v350
        %523 = vmatprep.subr.mxu0 %v355
        %524 = vmatpush1.msra.mxu0 %v354
        %525 = vmatprep.subr.mxu0 %v359
        %526 = vmatpush1.msra.mxu0 %v358
        %527 = vmatprep.subr.mxu0 %v363
        %528 = vmatpush1.msra.mxu0 %v362
        %529 = vmatprep.subr.mxu0 %v367
        %530 = vmatpush1.msra.mxu0 %v366
        %531 = vmatprep.subr.mxu0 %v371
        %532 = vmatpush1.msra.mxu0 %v370
        %533 = vmatprep.subr.mxu0 %v375
        %534 = vmatpush1.msra.mxu0 %v374
        %535 = vmatprep.subr.mxu0 %v379
        %536 = vmatpush1.msra.mxu0 %v378
        %537 = vmatprep.mubr.f32.mxu0 %v249
        %538 = vmatmul.mubr.f32.gmra.mrb[0].mxu0 %v251
        %v539 = vpop.f32.mrb[0].mxu0
        %v540 = vadd.f32 %v393, %v539
        %v541 = vpop.f32.mrb[0].mxu0
        %v542 = vadd.f32 %v397, %v541
        %543 = vdwg.mxu0
        %v544 = vxor.u32 %v469, 2147483648
        %v545 = vmul.f32 %v544, 1.442695
        %v546 = vpow.pop %v545
        %v547 = vadd.f32 %v546, 1.0
        %v548 = vrcp.pop %v547
        %v549 = vmul.f32 1.0, %v548
        %v550 = vxor.u32 %v471, 2147483648
        %v551 = vmul.f32 %v550, 1.442695
        %v552 = vpow.pop %v551
        %v553 = vadd.f32 %v552, 1.0
        %v554 = vrcp.pop %v553
        %v555 = vmul.f32 1.0, %v554
        %v556 = vmul.f32 %v549, %v542
        %v557 = vadd.f32 %v540, %v556
        %v558 = vtanh.pop %v557
        %v559 = vsub.f32 1.0, %v555
        %v560 = vmul.f32 %v559, %v558
        %v561 = vmul.f32 %v555, %v249
        %v562 = vadd.f32 %v560, %v561
        %563 = vst [vmem:[#allocation2] sm:$0x1] %v562
        %v564 = vld [vmem:[%s4] sm:$0xff]
        %v565 = vld [vmem:[%s4 + $0x8] sm:$0xff]
        %v566 = vld [vmem:[%s4 + $0x10] sm:$0xff]
        %v567 = vld [vmem:[%s4 + $0x18] sm:$0xff]
        %v568 = vld [vmem:[%s4 + $0x20] sm:$0xff]
        %v569 = vld [vmem:[%s4 + $0x28] sm:$0xff]
        %v570 = vld [vmem:[%s4 + $0x30] sm:$0xff]
        %v571 = vld [vmem:[%s4 + $0x38] sm:$0xff]
        %v572 = vld [vmem:[%s4 + $0x40] sm:$0xff]
        %v573 = vld [vmem:[%s4 + $0x48] sm:$0xff]
        %v574 = vld [vmem:[%s4 + $0x50] sm:$0xff]
        %v575 = vld [vmem:[%s4 + $0x58] sm:$0xff]
        %v576 = vld [vmem:[%s4 + $0x60] sm:$0xff]
        %v577 = vld [vmem:[%s4 + $0x68] sm:$0xff]
        %v578 = vld [vmem:[%s4 + $0x70] sm:$0xff]
        %v579 = vld [vmem:[%s4 + $0x78] sm:$0xff]
        %v580 = vld [vmem:[%s5] sm:$0x1]
        %581 = vmatprep.subr.mxu0 0.0
        %582 = vmatpush1.msra.mxu0 %v564
        %583 = vmatprep.subr.mxu0 0.0
        %584 = vmatpush1.msra.mxu0 %v565
        %585 = vmatprep.subr.mxu0 0.0
        %586 = vmatpush1.msra.mxu0 %v566
        %587 = vmatprep.subr.mxu0 0.0
        %588 = vmatpush1.msra.mxu0 %v567
        %589 = vmatprep.subr.mxu0 0.0
        %590 = vmatpush1.msra.mxu0 %v568
        %591 = vmatprep.subr.mxu0 0.0
        %592 = vmatpush1.msra.mxu0 %v569
        %593 = vmatprep.subr.mxu0 0.0
        %594 = vmatpush1.msra.mxu0 %v570
        %595 = vmatprep.subr.mxu0 0.0
        %596 = vmatpush1.msra.mxu0 %v571
        %597 = vmatprep.subr.mxu0 0.0
        %598 = vmatpush1.msra.mxu0 %v572
        %599 = vmatprep.subr.mxu0 0.0
        %600 = vmatpush1.msra.mxu0 %v573
        %601 = vmatprep.subr.mxu0 0.0
        %602 = vmatpush1.msra.mxu0 %v574
        %603 = vmatprep.subr.mxu0 0.0
        %604 = vmatpush1.msra.mxu0 %v575
        %605 = vmatprep.subr.mxu0 0.0
        %606 = vmatpush1.msra.mxu0 %v576
        %607 = vmatprep.subr.mxu0 0.0
        %608 = vmatpush1.msra.mxu0 %v577
        %609 = vmatprep.subr.mxu0 0.0
        %610 = vmatpush1.msra.mxu0 %v578
        %611 = vmatprep.subr.mxu0 0.0
        %612 = vmatpush1.msra.mxu0 %v579
        %613 = vmatprep.subr.mxu0 0.0
        %614 = vmatpush1.msra.mxu0 0.0
        %615 = vmatprep.subr.mxu0 0.0
        %616 = vmatpush1.msra.mxu0 0.0
        %617 = vmatprep.subr.mxu0 0.0
        %618 = vmatpush1.msra.mxu0 0.0
        %619 = vmatprep.subr.mxu0 0.0
        %620 = vmatpush1.msra.mxu0 0.0
        %621 = vmatprep.subr.mxu0 0.0
        %622 = vmatpush1.msra.mxu0 0.0
        %623 = vmatprep.subr.mxu0 0.0
        %624 = vmatpush1.msra.mxu0 0.0
        %625 = vmatprep.subr.mxu0 0.0
        %626 = vmatpush1.msra.mxu0 0.0
        %627 = vmatprep.subr.mxu0 0.0
        %628 = vmatpush1.msra.mxu0 0.0
        %629 = vmatprep.subr.mxu0 0.0
        %630 = vmatpush1.msra.mxu0 0.0
        %631 = vmatprep.subr.mxu0 0.0
        %632 = vmatpush1.msra.mxu0 0.0
        %633 = vmatprep.subr.mxu0 0.0
        %634 = vmatpush1.msra.mxu0 0.0
        %635 = vmatprep.subr.mxu0 0.0
        %636 = vmatpush1.msra.mxu0 0.0
        %637 = vmatprep.subr.mxu0 0.0
        %638 = vmatpush1.msra.mxu0 0.0
        %639 = vmatprep.subr.mxu0 0.0
        %640 = vmatpush1.msra.mxu0 0.0
        %641 = vmatprep.subr.mxu0 0.0
        %642 = vmatpush1.msra.mxu0 0.0
        %643 = vmatprep.subr.mxu0 0.0
        %644 = vmatpush1.msra.mxu0 0.0
        %645 = vmatprep.mubr.f32.mxu0 0.0
        %646 = vmatmul.mubr.f32.gmra.mrb[0].mxu0 %v562
        %v647 = vpop.f32.mrb[0].mxu0
        %v648 = vadd.f32 %v580, %v647
        %v649 = vpop.f32.mrb[0].mxu0
        %650 = vdwg.mxu0
        %vm651 = vcmask 1040384
        %v652 = vsel %vm651, %v648, -inf
        %653 = vmax.xlane.f32.xlu0 %v652
        %v654 = vpop.xlane.xlu0 %653
        %v655 = vsub.f32 %v648, %v654
        %v656 = vmul.f32 %v655, 1.442695
        %v657 = vpow.pop %v656
        %v658 = vsel %vm651, %v657, 0.0
        %659 = vadd.xlane.f32.xlu0 %v658
        %v660 = vpop.xlane.xlu0 %659
        %v661 = vlog2.pop %v660
        %v662 = vmul.f32 %v661, 0.6931472
        %v663 = vadd.f32 %v662, %v654
        %v664 = vsub.f32 %v648, %v663
        %s665 = scalar_lea.vmem %s6, %s20
        %666 = vst [vmem:[%s665] sm:$0x1] %v664
        // Predicated region
        $region49: #{gru_forward.1} parent=43 // pred_check
          %p667 = pneg %p159
        $region50: #{gru_forward.1} parent=43 // pred_check_branch
          %669 = sbr.rel (%p667) target = $region52
        $region51: #{gru_forward.1} parent=43 // pred_region
          _
        $region52: #{gru_forward.1} parent=43 // pred_fallthru
          _
        // Predicated region
        $region53: #{gru_forward.1} parent=43 // pred_check
          %p670 = pneg %p180
        $region54: #{gru_forward.1} parent=43 // pred_check_branch
          %672 = sbr.rel (%p670) target = $region56
        $region55: #{gru_forward.1} parent=43 // pred_region
          %s674 = ssub.s32 16, 16
          %675 = vsyncadd [#allocation3], %s674
          %s677 = sshll.u32 [#allocation2], 4
          %s678 = int_to_ptr.vmem [resolvable:$true] %s677
          %680 = dma.vmem_to_hbm [thread:$0]  %s678, 16, %s7, [#allocation3]
        $region56: #{gru_forward.1} parent=43 // pred_fallthru
          _
        // Predicated region
        $region57: #{gru_forward.1} parent=43 // pred_check
          %p681 = pneg %p159
        $region58: #{gru_forward.1} parent=43 // pred_check_branch
          %683 = sbr.rel (%p681) target = $region60
        $region59: #{gru_forward.1} parent=43 // pred_region
          _
        $region60: #{gru_forward.1} parent=43 // pred_fallthru
          _
        // Predicated region
        $region61: #{gru_forward.1} parent=43 // pred_check
          %p684 = pneg %p180
        $region62: #{gru_forward.1} parent=43 // pred_check_branch
          %686 = sbr.rel (%p684) target = $region64
        $region63: #{gru_forward.1} parent=43 // pred_region
          %687 = dma.done [#allocation3], 16
        $region64: #{gru_forward.1} parent=43 // pred_fallthru
          _
      $region44: #{gru_forward.1} parent=5 // pred_fallthru
        _
      %p688 = scmp.le.s32.totalorder 2, %s15
      // Predicated region
      $region65: #{gru_forward.1} parent=5 // pred_check
        %p689 = pneg %p688
      $region66: #{gru_forward.1} parent=5 // pred_check_branch
        %691 = sbr.rel (%p689) target = $region68
      $region67: #{gru_forward.1} parent=5 // pred_region
        %s692 = ssub.s32 %s15, 2
      $region68: #{gru_forward.1} parent=5 // pred_fallthru
        _
    $region6: #{gru_forward.1} parent=1 // loop_footer
      %s19 = sadd.s32 1, %s15
    $region7: #{gru_forward.1} parent=1 // loop_footer_branch
      %14 = sbr.rel target = $region3
    $region8: #{gru_forward.1} parent=1 // loop_exit
      _
    %693 = vsyncpa [#allocation3], 1
    %s694 = scalar_lea.sflag [#allocation3], 1
    %695 = vsyncpa %s694, 1

</llo_original>
